<compile_context>
chip_gen: v5e
topology: v5e:2x2
jax: 0.10.0
libtpu: 0.0.40
codegen_flags: <defaults>
</compile_context>

<pallas_src>
import jax
import jax.numpy as jnp
from jax import lax
from jax.experimental import pallas as pl
from jax.experimental.pallas import tpu as pltpu

_LANES = 128
_SUBLANE = 16            # covers f32 (8-row) and bf16 (16-row) sublane packing
_MAX_BLOCK_ROWS = 2048   # 1 MiB/block @ f32; 2 inputs x 2 bufs ≈ 4 MiB VMEM
_N_SHARDS = 2            # megacore sharding on v7x; harmless elsewhere


def _cdiv(a, b):
    return (a + b - 1) // b


def _make_kernel(block_rows, steps, valid_rows, needs_mask):
    def kernel(p_ref, t_ref, out_ref, sq_acc, ab_acc):
        c = pl.program_id(0)   # shard axis (parallel across TensorCores)
        i = pl.program_id(1)   # reduction steps within a shard (arbitrary)

        @pl.when(i == 0)
        def _init():
            sq_acc[...] = jnp.zeros_like(sq_acc)
            ab_acc[...] = jnp.zeros_like(ab_acc)

        d = p_ref[...].astype(jnp.float32) - t_ref[...].astype(jnp.float32)
        if needs_mask:
            # Edge blocks (and fully-redundant clamped blocks) contain
            # undefined rows beyond the valid range; zero their contribution
            # BEFORE squaring so garbage (inf/NaN) cannot propagate.
            row0 = (c * steps + i) * block_rows
            row_ids = lax.broadcasted_iota(jnp.int32, d.shape, 0) + row0
            d = jnp.where(row_ids < valid_rows, d, 0.0)

        # Fold the (block_rows, 128) tile into a single vreg-shaped (8, 128)
        # partial.  The reshape is (8,128)-tile aligned (block_rows % 8 == 0),
        # so it is layout-preserving; the sum is pure VPU adds with only a
        # ~4 KiB accumulator read-modify-write per step -- all hidden under
        # the input DMA.
        d3 = d.reshape(-1, 8, _LANES)
        sq_acc[...] += (d3 * d3).sum(axis=0)
        ab_acc[...] += jnp.abs(d3).sum(axis=0)

        @pl.when(i == steps - 1)
        def _finalize():
            sq = jnp.sum(sq_acc[...])
            ab = jnp.sum(ab_acc[...])
            lane = lax.broadcasted_iota(jnp.int32, (1, _LANES), 1)
            # One unmasked lane-dense store: lane 0 = sum-sq, lane 1 = sum-abs.
            out_ref[...] = jnp.where(lane == 0, sq,
                                     jnp.where(lane == 1, ab, 0.0))

    return kernel


def _loss_partials(pred2d, tgt2d):
    """pred2d / tgt2d: (rows, 128) views in their ORIGINAL dtype.
    Returns (sum((p-t)^2), sum(|p-t|)) as f32 scalars."""
    rows, lanes = pred2d.shape
    assert lanes == _LANES and rows >= _SUBLANE

    block_rows = max(_SUBLANE,
                     min(_MAX_BLOCK_ROWS, (rows // _SUBLANE) * _SUBLANE))
    total_blocks = _cdiv(rows, block_rows)
    n_shards = _N_SHARDS if total_blocks >= _N_SHARDS else 1
    steps = _cdiv(total_blocks, n_shards)
    needs_mask = (n_shards * steps * block_rows) != rows

    kernel = _make_kernel(block_rows, steps, rows, needs_mask)

    def in_map(c, i):
        # Clamp so redundant trailing steps (when blocks don't split evenly
        # across shards) re-read the last block; the in-kernel mask zeroes it.
        return (jnp.minimum(c * steps + i, total_blocks - 1), 0)

    itemsize = jnp.dtype(pred2d.dtype).itemsize
    n_elem = rows * _LANES
    cost = pl.CostEstimate(
        flops=5 * n_elem,
        transcendentals=0,
        bytes_accessed=2 * n_elem * itemsize + n_shards * _LANES * 4,
    )

    out = pl.pallas_call(
        kernel,
        out_shape=jax.ShapeDtypeStruct((n_shards, _LANES), jnp.float32),
        grid_spec=pltpu.PrefetchScalarGridSpec(
            num_scalar_prefetch=0,
            grid=(n_shards, steps),
            in_specs=[
                pl.BlockSpec((block_rows, _LANES), in_map),
                pl.BlockSpec((block_rows, _LANES), in_map),
            ],
            out_specs=pl.BlockSpec((1, _LANES), lambda c, i: (c, 0)),
            scratch_shapes=[
                pltpu.VMEM((8, _LANES), jnp.float32),
                pltpu.VMEM((8, _LANES), jnp.float32),
            ],
        ),
        compiler_params=pltpu.CompilerParams(
            dimension_semantics=("parallel", "arbitrary"),
        ),
        cost_estimate=cost,
    )(pred2d, tgt2d)

    sq_sum = jnp.sum(out[:, 0])
    ab_sum = jnp.sum(out[:, 1])
    return sq_sum, ab_sum


def _to_lane_dense_2d(x):
    """Lane-dense (rows, 128) view of x in its ORIGINAL dtype (no up-cast copy).

    No copy at all when x.size is a multiple of 128 (the common case); otherwise
    only the sub-128-element tail (and tiny tensors, < 16*128 elems) gets zero
    padding, which is identical for pred/target and so contributes 0 to both
    sums."""
    flat = jnp.ravel(x)
    n = flat.shape[0]
    rows = max(_cdiv(n, _LANES), _SUBLANE)
    padded = rows * _LANES
    if padded != n:
        # TODO(synk): jnp.pad still materializes a copy when triggered; a fully
        # copy-free ragged tail would need a 1-D block layout + scalar-prefetch
        # element count.
        flat = jnp.pad(flat, (0, padded - n))
    return flat.reshape(rows, _LANES)


class CombinedLossPallas:
    """JAX/Pallas mirror of CombinedLoss with two built-in criteria (MSE, L1)."""

    def __init__(self, weights=(1.0, 1.0)):
        total = sum(weights)
        # Faithful to the reference: weights normalized but NOT used in forward.
        self.weights = [w / total for w in weights]

    def __call__(self, predictions: dict, targets: dict) -> jnp.ndarray:
        pred = predictions["out"]
        tgt = targets["out"]
        n_elem = pred.size

        p2d = _to_lane_dense_2d(pred)
        t2d = _to_lane_dense_2d(tgt)

        sq_sum, ab_sum = _loss_partials(p2d, t2d)

        mse_loss = sq_sum / n_elem   # torch.nn.MSELoss(reduction='mean')
        l1_loss = ab_sum / n_elem    # torch.nn.L1Loss(reduction='mean')

        # loss = torch.stack(loss_results, dim=0).sum()
        loss = jnp.stack([mse_loss, l1_loss], axis=0).sum()
        return loss


if __name__ == "__main__":
    key = jax.random.PRNGKey(0)
    kp, kt = jax.random.split(key)

    # Small NCHW shapes consistent with a segmentation/regression head.
    B, C, H, W = 2, 4, 16, 16
    pred = jax.random.normal(kp, (B, C, H, W), dtype=jnp.float32)
    tgt = jax.random.normal(kt, (B, C, H, W), dtype=jnp.float32)

    combined = CombinedLossPallas(weights=[0.7, 0.3])
    loss = combined({"out": pred}, {"out": tgt})
    loss = jax.block_until_ready(loss)

    # Reference check (same semantics as torch MSE + L1, mean reduction).
    ref = jnp.mean((pred - tgt) ** 2) + jnp.mean(jnp.abs(pred - tgt))
    assert jnp.allclose(loss, ref, rtol=1e-5, atol=1e-5), (loss, ref)

    # Second check: exercises the ragged-edge mask + 2-shard (megacore) path.
    kp2, kt2 = jax.random.split(kt)
    pred2 = jax.random.normal(kp2, (2, 4, 16, 20), dtype=jnp.float32)
    tgt2 = jax.random.normal(kt2, (2, 4, 16, 20), dtype=jnp.float32)
    loss2 = combined({"out": pred2}, {"out": tgt2})
    loss2 = jax.block_until_ready(loss2)
    ref2 = jnp.mean((pred2 - tgt2) ** 2) + jnp.mean(jnp.abs(pred2 - tgt2))
    assert jnp.allclose(loss2, ref2, rtol=1e-5, atol=1e-5), (loss2, ref2)

    print("KERNEL_OK")
</pallas_src>

<mosaic_0001>
module attributes {stable_mosaic.version = 11 : i64} {
  func.func @kernel(%arg0: i32, %arg1: i32, %arg2: memref<16x128xf32, #tpu.memory_space<vmem>>, %arg3: memref<16x128xf32, #tpu.memory_space<vmem>>, %arg4: memref<1x128xf32, #tpu.memory_space<vmem>>, %arg5: memref<8x128xf32, #tpu.memory_space<vmem>>, %arg6: memref<8x128xf32, #tpu.memory_space<vmem>>) attributes {dimension_semantics = [#tpu.dimension_semantics<parallel>, #tpu.dimension_semantics<arbitrary>], iteration_bounds = array<i64: 1, 1>, scalar_prefetch = 0 : i64, scratch_operands = 2 : i64, tpu.core_type = #tpu.core_type<tc>, window_params = [{transform_indices = @transform_0, window_bounds = array<i64: 16, 128>}, {transform_indices = @transform_1, window_bounds = array<i64: 16, 128>}, {transform_indices = @transform_2, window_bounds = array<i64: 1, 128>}]} {
    %c0_i32 = arith.constant 0 : i32
    %0 = arith.cmpi eq, %arg1, %c0_i32 : i32
    %1 = arith.extui %0 : i1 to i32
    %c0_i32_0 = arith.constant 0 : i32
    %2 = arith.cmpi ne, %1, %c0_i32_0 : i32
    scf.if %2 {
      %cst_15 = arith.constant 0.000000e+00 : f32
      %20 = vector.broadcast %cst_15 : f32 to vector<8x128xf32>
      %c0_16 = arith.constant 0 : index
      %c0_17 = arith.constant 0 : index
      %21 = vector.load %arg5[%c0_16, %c0_17] : memref<8x128xf32, #tpu.memory_space<vmem>>, vector<8x128xf32>
      tpu.vector_store %arg5[%c0_16, %c0_17], %20 {strides = array<i32>} : memref<8x128xf32, #tpu.memory_space<vmem>>, vector<8x128xf32>,
      %cst_18 = arith.constant 0.000000e+00 : f32
      %22 = vector.broadcast %cst_18 : f32 to vector<8x128xf32>
      %c0_19 = arith.constant 0 : index
      %c0_20 = arith.constant 0 : index
      %23 = vector.load %arg6[%c0_19, %c0_20] : memref<8x128xf32, #tpu.memory_space<vmem>>, vector<8x128xf32>
      tpu.vector_store %arg6[%c0_19, %c0_20], %22 {strides = array<i32>} : memref<8x128xf32, #tpu.memory_space<vmem>>, vector<8x128xf32>,
    } else {
    }
    %c0 = arith.constant 0 : index
    %c0_1 = arith.constant 0 : index
    %3 = vector.load %arg2[%c0, %c0_1] : memref<16x128xf32, #tpu.memory_space<vmem>>, vector<16x128xf32>
    %c0_2 = arith.constant 0 : index
    %c0_3 = arith.constant 0 : index
    %4 = vector.load %arg3[%c0_2, %c0_3] : memref<16x128xf32, #tpu.memory_space<vmem>>, vector<16x128xf32>
    %5 = arith.subf %3, %4 : vector<16x128xf32>
    %6 = vector.shape_cast %5 : vector<16x128xf32> to vector<2x8x128xf32>
    %c0_4 = arith.constant 0 : index
    %c0_5 = arith.constant 0 : index
    %7 = vector.load %arg5[%c0_4, %c0_5] : memref<8x128xf32, #tpu.memory_space<vmem>>, vector<8x128xf32>
    %8 = arith.mulf %6, %6 : vector<2x8x128xf32>
    %cst = arith.constant dense<0.000000e+00> : vector<8x128xf32>
    %9 = vector.multi_reduction <add>, %8, %cst [0] : vector<2x8x128xf32> to vector<8x128xf32>
    %10 = arith.addf %7, %9 : vector<8x128xf32>
    %c0_6 = arith.constant 0 : index
    %c0_7 = arith.constant 0 : index
    %11 = vector.load %arg5[%c0_6, %c0_7] : memref<8x128xf32, #tpu.memory_space<vmem>>, vector<8x128xf32>
    tpu.vector_store %arg5[%c0_6, %c0_7], %10 {strides = array<i32>} : memref<8x128xf32, #tpu.memory_space<vmem>>, vector<8x128xf32>,
    %c0_8 = arith.constant 0 : index
    %c0_9 = arith.constant 0 : index
    %12 = vector.load %arg6[%c0_8, %c0_9] : memref<8x128xf32, #tpu.memory_space<vmem>>, vector<8x128xf32>
    %13 = math.absf %6 : vector<2x8x128xf32>
    %cst_10 = arith.constant dense<0.000000e+00> : vector<8x128xf32>
    %14 = vector.multi_reduction <add>, %13, %cst_10 [0] : vector<2x8x128xf32> to vector<8x128xf32>
    %15 = arith.addf %12, %14 : vector<8x128xf32>
    %c0_11 = arith.constant 0 : index
    %c0_12 = arith.constant 0 : index
    %16 = vector.load %arg6[%c0_11, %c0_12] : memref<8x128xf32, #tpu.memory_space<vmem>>, vector<8x128xf32>
    tpu.vector_store %arg6[%c0_11, %c0_12], %15 {strides = array<i32>} : memref<8x128xf32, #tpu.memory_space<vmem>>, vector<8x128xf32>,
    %c0_i32_13 = arith.constant 0 : i32
    %17 = arith.cmpi eq, %arg1, %c0_i32_13 : i32
    %18 = arith.extui %17 : i1 to i32
    %c0_i32_14 = arith.constant 0 : i32
    %19 = arith.cmpi ne, %18, %c0_i32_14 : i32
    scf.if %19 {
      %c0_15 = arith.constant 0 : index
      %c0_16 = arith.constant 0 : index
      %20 = vector.load %arg5[%c0_15, %c0_16] : memref<8x128xf32, #tpu.memory_space<vmem>>, vector<8x128xf32>
      %21 = vector.shape_cast %20 : vector<8x128xf32> to vector<1x8x128xf32>
      %cst_17 = arith.constant dense<0.000000e+00> : vector<1xf32>
      %22 = vector.multi_reduction <add>, %21, %cst_17 [1, 2] : vector<1x8x128xf32> to vector<1xf32>
      %23 = vector.shape_cast %22 : vector<1xf32> to vector<1x1x1xf32>
      %24 = vector.extract %23[0, 0, 0] : f32 from vector<1x1x1xf32>
      %c0_18 = arith.constant 0 : index
      %c0_19 = arith.constant 0 : index
      %25 = vector.load %arg6[%c0_18, %c0_19] : memref<8x128xf32, #tpu.memory_space<vmem>>, vector<8x128xf32>
      %26 = vector.shape_cast %25 : vector<8x128xf32> to vector<1x8x128xf32>
      %cst_20 = arith.constant dense<0.000000e+00> : vector<1xf32>
      %27 = vector.multi_reduction <add>, %26, %cst_20 [1, 2] : vector<1x8x128xf32> to vector<1xf32>
      %28 = vector.shape_cast %27 : vector<1xf32> to vector<1x1x1xf32>
      %29 = vector.extract %28[0, 0, 0] : f32 from vector<1x1x1xf32>
      %30 = tpu.iota {dimensions = array<i32: 1>} : vector<1x128xi32>
      %c0_i32_21 = arith.constant 0 : i32
      %31 = vector.broadcast %c0_i32_21 : i32 to vector<1x128xi32>
      %32 = arith.cmpi eq, %30, %31 : vector<1x128xi32>
      %c1_i32 = arith.constant 1 : i32
      %33 = vector.broadcast %c1_i32 : i32 to vector<1x128xi32>
      %34 = arith.cmpi eq, %30, %33 : vector<1x128xi32>
      %cst_22 = arith.constant 0.000000e+00 : f32
      %35 = vector.broadcast %29 : f32 to vector<1x128xf32>
      %36 = vector.broadcast %cst_22 : f32 to vector<1x128xf32>
      %37 = arith.select %34, %35, %36 : vector<1x128xi1>, vector<1x128xf32>
      %38 = vector.broadcast %24 : f32 to vector<1x128xf32>
      %39 = arith.select %32, %38, %37 : vector<1x128xi1>, vector<1x128xf32>
      %c0_23 = arith.constant 0 : index
      %c0_24 = arith.constant 0 : index
      %40 = vector.load %arg4[%c0_23, %c0_24] : memref<1x128xf32, #tpu.memory_space<vmem>>, vector<1x128xf32>
      tpu.vector_store %arg4[%c0_23, %c0_24], %39 {strides = array<i32>} : memref<1x128xf32, #tpu.memory_space<vmem>>, vector<1x128xf32>,
    } else {
    }
    return
  }
  func.func @transform_0(%arg0: i32, %arg1: i32) -> (i32, i32) {
    %c1_i32 = arith.constant 1 : i32
    %0 = arith.muli %arg0, %c1_i32 : i32
    %1 = arith.addi %0, %arg1 : i32
    %c0_i32 = arith.constant 0 : i32
    %2 = arith.minsi %1, %c0_i32 : i32
    %c0_i32_0 = arith.constant 0 : i32
    %c0_i32_1 = arith.constant 0 : i32
    return %2, %c0_i32_0 : i32, i32
  }
  func.func @transform_1(%arg0: i32, %arg1: i32) -> (i32, i32) {
    %c1_i32 = arith.constant 1 : i32
    %0 = arith.muli %arg0, %c1_i32 : i32
    %1 = arith.addi %0, %arg1 : i32
    %c0_i32 = arith.constant 0 : i32
    %2 = arith.minsi %1, %c0_i32 : i32
    %c0_i32_0 = arith.constant 0 : i32
    %c0_i32_1 = arith.constant 0 : i32
    return %2, %c0_i32_0 : i32, i32
  }
  func.func @transform_2(%arg0: i32, %arg1: i32) -> (i32, i32) {
    %c0_i32 = arith.constant 0 : i32
    %c0_i32_0 = arith.constant 0 : i32
    return %arg0, %c0_i32 : i32, i32
  }
}

</mosaic_0001>

<llo_original>
// kernel: tpu_custom_call.1
$region0: #{tpu_custom_call.1}
  #allocation0 [shape = 'u32[]', space=smem, size = 0x4, offset = 0x4, fixed_abs, tag = 'smem constant byte address 0x4 - core index']
  #allocation1 [shape = 'u32[72,128]{1,0:T(1,128)}', space=vmem, size = 0x9000, scoped, tag = 'internal scratch']
  #allocation2 [shape = 'f32[8,128]{1,0:T(8,128)}', space=vmem, size = 0x1000, scoped, tag = 'scratch operand']
  #allocation3 [shape = 'f32[8,128]{1,0:T(8,128)}', space=vmem, size = 0x1000, scoped, tag = 'scratch operand']
  %s0 = inlined_call_operand.hbm [shape: f32[16,128], index: 0, kind: input, shape index: {}]
  %s1 = inlined_call_operand.hbm [shape: f32[16,128], index: 1, kind: input, shape index: {}]
  %s2 = inlined_call_operand.hbm [shape: f32[1,128], index: 2, kind: output, shape index: {}]
  %s3 = sld [smem:[#allocation0]]
  $region34: #{tpu_custom_call.1} parent=0
    _
  %s5 = ssub.s32 1, %s3
  %s6 = scalar_select 0, %s5, %s3
  $region1: #{tpu_custom_call.1} parent=0
    #allocation4 [shape = 'u8[8192]{0}', space=vmem, size = 0x2000, scoped, tag = 'input window, operand 0, single buffered']
    #allocation5 [shape = 's32[1]{0}', space=sflag, size = 0x4, scoped, tag = 'scoped memory for tpu_custom_call.1']
    #allocation6 [shape = 's32[1]{0}', space=sflag, size = 0x4, scoped, tag = 'scoped memory for tpu_custom_call.1']
    #allocation7 [shape = 'u8[8192]{0}', space=vmem, size = 0x2000, scoped, tag = 'input window, operand 1, single buffered']
    #allocation8 [shape = 's32[1]{0}', space=sflag, size = 0x4, scoped, tag = 'scoped memory for tpu_custom_call.1']
    #allocation9 [shape = 'u8[512]{0}', space=vmem, size = 0x400, scoped, tag = 'output window, operand 0, single buffered']
    %7 = vsyncpa [#allocation5], 0
    %8 = vsyncpa [#allocation8], 0
    %9 = vsyncpa [#allocation6], 0
    // Predicated region
    $region2: #{tpu_custom_call.1} parent=1 // pred_check
      _
    $region3: #{tpu_custom_call.1} parent=1 // pred_check_branch
      %11 = sbr.rel (0) target = $region5
    $region4: #{tpu_custom_call.1} parent=1 // pred_region
      %s12 = sadd.s32 0, 0
      %p13 = scmp.lt.s32.totalorder %s12, 0
      %s14 = scalar_select %p13, %s12, 0
      %s15 = smul.u32 2, %s14
      %17 = vsyncadd [#allocation5], 0
      %s18 = smul.addr %s15, 8
      %s19 = scalar_lea.hbm %s0, %s18
      %s20 = sshll.u32 %s19, 4
      %s21 = int_to_ptr.hbm [resolvable:$true] %s20
      %s22 = sshll.u32 [#allocation4], 4
      %s23 = int_to_ptr.vmem [resolvable:$true] %s22
      %28 = dma.hbm_to_vmem [thread:$0]  %s21, 256, %s23, [#allocation5], 128, 128, 8
    $region5: #{tpu_custom_call.1} parent=1 // pred_fallthru
      _
    // Predicated region
    $region6: #{tpu_custom_call.1} parent=1 // pred_check
      _
    $region7: #{tpu_custom_call.1} parent=1 // pred_check_branch
      %30 = sbr.rel (0) target = $region9
    $region8: #{tpu_custom_call.1} parent=1 // pred_region
      %s31 = sadd.s32 0, 0
      %p32 = scmp.lt.s32.totalorder %s31, 0
      %s33 = scalar_select %p32, %s31, 0
      %s34 = smul.u32 2, %s33
      %36 = vsyncadd [#allocation8], 0
      %s37 = smul.addr %s34, 8
      %s38 = scalar_lea.hbm %s1, %s37
      %s39 = sshll.u32 %s38, 4
      %s40 = int_to_ptr.hbm [resolvable:$true] %s39
      %s41 = sshll.u32 [#allocation7], 4
      %s42 = int_to_ptr.vmem [resolvable:$true] %s41
      %47 = dma.hbm_to_vmem [thread:$0]  %s40, 256, %s42, [#allocation8], 128, 128, 8
    $region9: #{tpu_custom_call.1} parent=1 // pred_fallthru
      _
    // Predicated region
    $region10: #{tpu_custom_call.1} parent=1 // pred_check
      _
    $region11: #{tpu_custom_call.1} parent=1 // pred_check_branch
      %49 = sbr.rel (0) target = $region13
    $region12: #{tpu_custom_call.1} parent=1 // pred_region
      %51 = dma.done [#allocation5], 256
    $region13: #{tpu_custom_call.1} parent=1 // pred_fallthru
      _
    // Predicated region
    $region14: #{tpu_custom_call.1} parent=1 // pred_check
      _
    $region15: #{tpu_custom_call.1} parent=1 // pred_check_branch
      %53 = sbr.rel (0) target = $region17
    $region16: #{tpu_custom_call.1} parent=1 // pred_region
      %55 = dma.done [#allocation8], 256
    $region17: #{tpu_custom_call.1} parent=1 // pred_fallthru
      _
    %s56 = sadd.s32 0, 0
    %p57 = scmp.lt.s32.totalorder %s56, 0
    %s58 = scalar_select %p57, %s56, 0
    %s59 = smul.u32 2, %s58
    %s60 = sadd.s32 0, 0
    %p61 = scmp.lt.s32.totalorder %s60, 0
    %s62 = scalar_select %p61, %s60, 0
    %s63 = smul.u32 2, %s62
    %p64 = scmp.eq.s32.totalorder 0, 0
    // Predicated region
    $region18: #{tpu_custom_call.1} parent=1 // pred_check
      %p65 = pneg %p64
    $region19: #{tpu_custom_call.1} parent=1 // pred_check_branch
      %67 = sbr.rel (%p65) target = $region21
    $region20: #{tpu_custom_call.1} parent=1 // pred_region
      %68 = vst [vmem:[#allocation2] sm:$0xff] 0.0
      %69 = vst [vmem:[#allocation3] sm:$0xff] 0.0
    $region21: #{tpu_custom_call.1} parent=1 // pred_fallthru
      _
    %v70 = vld [vmem:[#allocation4] sm:$0xff]
    %v71 = vld [vmem:[#allocation4 + $0x8] sm:$0xff]
    %v72 = vld [vmem:[#allocation7] sm:$0xff]
    %v73 = vld [vmem:[#allocation7 + $0x8] sm:$0xff]
    %v74 = vsub.f32 %v70, %v72
    %v75 = vsub.f32 %v71, %v73
    %v76 = vld [vmem:[#allocation2] sm:$0xff]
    %v77 = vmul.f32 %v74, %v74
    %v78 = vmul.f32 %v75, %v75
    %v79 = vadd.f32 %v77, %v78
    %v80 = vadd.f32 %v76, %v79
    %81 = vst [vmem:[#allocation2] sm:$0xff] %v80
    %v82 = vld [vmem:[#allocation3] sm:$0xff]
    %v83 = vand.u32 2147483647, %v74
    %v84 = vand.u32 2147483647, %v75
    %v85 = vadd.f32 %v83, %v84
    %v86 = vadd.f32 %v82, %v85
    %87 = vst [vmem:[#allocation3] sm:$0xff] %v86
    // Predicated region
    $region22: #{tpu_custom_call.1} parent=1 // pred_check
      %p88 = pneg %p64
    $region23: #{tpu_custom_call.1} parent=1 // pred_check_branch
      %90 = sbr.rel (%p88) target = $region25
    $region24: #{tpu_custom_call.1} parent=1 // pred_region
      %v91 = vld [vmem:[#allocation2] sm:$0xff]
      %92 = vadd.xlane.f32.xlu0 %v91
      %v93 = vpop.xlane.xlu0 %92
      %v94 = vrot.slane %v93, 4
      %v95 = vadd.f32 %v93, %v94
      %v96 = vrot.slane %v95, 2
      %v97 = vadd.f32 %v95, %v96
      %v98 = vrot.slane %v97, 1
      %v99 = vadd.f32 %v97, %v98
      %s100 = vtos %v99
      %v101 = vld [vmem:[#allocation3] sm:$0xff]
      %102 = vadd.xlane.f32.xlu0 %v101
      %v103 = vpop.xlane.xlu0 %102
      %v104 = vrot.slane %v103, 4
      %v105 = vadd.f32 %v103, %v104
      %v106 = vrot.slane %v105, 2
      %v107 = vadd.f32 %v105, %v106
      %v108 = vrot.slane %v107, 1
      %v109 = vadd.f32 %v107, %v108
      %s110 = vtos %v109
      %v111 = vlaneseq
      %v112 = vand.u32 %v111, 127
      %vm113 = vcmp.eq.s32.totalorder %v112, 0
      %vm114 = vcmp.eq.s32.totalorder %v112, 1
      %v115 = vstv %s110
      %v116 = vsel %vm114, %v115, 0.0
      %v117 = vstv %s100
      %v118 = vsel %vm113, %v117, %v116
      %119 = vst [vmem:[#allocation9] sm:$0x1] %v118
    $region25: #{tpu_custom_call.1} parent=1 // pred_fallthru
      _
    // Predicated region
    $region26: #{tpu_custom_call.1} parent=1 // pred_check
      _
    $region27: #{tpu_custom_call.1} parent=1 // pred_check_branch
      %121 = sbr.rel (0) target = $region29
    $region28: #{tpu_custom_call.1} parent=1 // pred_region
      %123 = vsyncadd [#allocation6], 0
      %s125 = sshll.u32 [#allocation9], 4
      %s126 = int_to_ptr.vmem [resolvable:$true] %s125
      %s127 = sshll.u32 %s2, 4
      %s128 = int_to_ptr.hbm [resolvable:$true] %s127
      %130 = dma.vmem_to_hbm [thread:$0]  %s126, 16, %s128, [#allocation6]
    $region29: #{tpu_custom_call.1} parent=1 // pred_fallthru
      _
    // Predicated region
    $region30: #{tpu_custom_call.1} parent=1 // pred_check
      _
    $region31: #{tpu_custom_call.1} parent=1 // pred_check_branch
      %132 = sbr.rel (0) target = $region33
    $region32: #{tpu_custom_call.1} parent=1 // pred_region
      %134 = dma.done [#allocation6], 16
    $region33: #{tpu_custom_call.1} parent=1 // pred_fallthru
      _
    %135 = vsyncpa [#allocation5], 1
    %136 = vsyncpa [#allocation8], 1
    %137 = vsyncpa [#allocation6], 1

</llo_original>
